<compile_context>
chip_gen: v7x
topology: tpu7x:2x2x1
jax: 0.10.0
libtpu: 0.0.40
codegen_flags: <defaults>
</compile_context>

<pallas_src>
import jax
import jax.numpy as jnp
from jax.experimental import pallas as pl
from jax.experimental.pallas import tpu as pltpu


def residual_conv1x1_kernel(x_ref, w_ref, b_ref, o_ref):
    """Fused 1x1 conv + bias + residual on a (1, C, TILE_HW) block.

    x_ref, o_ref : (1, C, TILE_HW) in VMEM (lanes = spatial pixels)
    w_ref        : (C, C) in SMEM, PyTorch orientation (C_out, C_in)
    b_ref        : (C,)   in SMEM
    """
    c = x_ref.shape[1]
    x = x_ref[0].astype(jnp.float32)  # (C, TILE_HW), widen for math (v5e-safe)

    rows = []
    for co in range(c):
        # residual term + bias, shape (1, TILE_HW)
        acc = x[co:co + 1, :] + b_ref[co]
        # channel mix: 4 scalar-broadcast MACs per output channel (VPU)
        for ci in range(c):
            acc = acc + w_ref[co, ci] * x[ci:ci + 1, :]
        rows.append(acc)

    o_ref[0] = jnp.concatenate(rows, axis=0).astype(o_ref.dtype)


def residual_conv1x1(x_nchw, w, b, *, max_tile_hw=2048):
    """Residual(Conv2d(C, C, kernel_size=1))(x) for NCHW input.

    x_nchw : (N, C, H, W)   any float dtype (f32 / bf16)
    w      : (C, C) f32     PyTorch conv weight, (C_out, C_in)
    b      : (C,)  f32      PyTorch conv bias
    """
    assert max_tile_hw % 128 == 0
    N, C, H, W = x_nchw.shape
    hw = H * W

    # NCHW -> (N, C, H*W): contiguous reshape, no transpose / no extra HBM pass.
    x3 = x_nchw.reshape(N, C, hw)

    # Whole spatial row per step if it fits, else lane-aligned tiles + tail pad.
    tile_hw = hw if hw <= max_tile_hw else max_tile_hw
    grid = (N, pl.cdiv(hw, tile_hw))

    out3 = pl.pallas_call(
        residual_conv1x1_kernel,
        out_shape=jax.ShapeDtypeStruct((N, C, hw), x_nchw.dtype),
        grid_spec=pltpu.PrefetchScalarGridSpec(
            num_scalar_prefetch=0,
            grid=grid,
            in_specs=[
                # x tile: (1, C, tile_hw), lane-dense last dim
                pl.BlockSpec((1, C, tile_hw), lambda n, p: (n, 0, p)),
                # conv weight / bias as SMEM scalars (tiny, resident)
                pl.BlockSpec(memory_space=pltpu.MemorySpace.SMEM),
                pl.BlockSpec(memory_space=pltpu.MemorySpace.SMEM),
            ],
            out_specs=pl.BlockSpec((1, C, tile_hw), lambda n, p: (n, 0, p)),
        ),
        compiler_params=pltpu.CompilerParams(
            # both grid axes are independent -> megacore sharding on v7x
            dimension_semantics=("parallel", "parallel"),
        ),
        # TODO(synk): input_output_aliases={0: 0} would reuse x's HBM buffer,
        # but is left off so callers may keep using x after the call.
    )(x3, w, b)

    return out3.reshape(N, C, H, W)


if __name__ == "__main__":
    key = jax.random.PRNGKey(0)
    kx, kw, kb = jax.random.split(key, 3)

    # Small shapes consistent with the UNet context: NCHW = [2, 4, 16, 16]
    N, C, H, W = 2, 4, 16, 16
    x = jax.random.normal(kx, (N, C, H, W), dtype=jnp.float32)

    # fn = Conv2d(C, C, kernel_size=1): weight in PyTorch orientation
    # (C_out, C_in) == conv.weight.squeeze(-1).squeeze(-1); non-symmetric so
    # orientation bugs would be caught by the reference check.
    w = jax.random.normal(kw, (C, C), dtype=jnp.float32) * 0.1
    b = jax.random.normal(kb, (C,), dtype=jnp.float32) * 0.1

    out = residual_conv1x1(x, w, b)
    out = jax.block_until_ready(out)

    # Pure-JAX reference: Residual(1x1 conv)(x) = conv(x) + x
    ref = jnp.einsum("oi,nihw->nohw", w, x) + b[None, :, None, None] + x

    assert out.shape == x.shape and out.dtype == x.dtype
    assert jnp.allclose(out, ref, atol=1e-5, rtol=1e-5)

    print("KERNEL_OK")
</pallas_src>

<mosaic_0001>
module attributes {stable_mosaic.version = 11 : i64} {
  func.func @residual_conv1x1_kernel(%arg0: i32, %arg1: i32, %arg2: memref<1x4x256xf32, #tpu.memory_space<vmem>>, %arg3: memref<4x4xf32, #tpu.memory_space<smem>>, %arg4: memref<4xf32, #tpu.memory_space<smem>>, %arg5: memref<1x4x256xf32, #tpu.memory_space<vmem>>) attributes {dimension_semantics = [#tpu.dimension_semantics<parallel>, #tpu.dimension_semantics<parallel>], iteration_bounds = array<i64: 2, 1>, scalar_prefetch = 0 : i64, scratch_operands = 0 : i64, tpu.core_type = #tpu.core_type<tc>, window_params = [{transform_indices = @transform_0, window_bounds = array<i64: 1, 4, 256>}, {transform_indices = @transform_1, window_bounds = array<i64: 4, 4>}, {transform_indices = @transform_2, window_bounds = array<i64: 4>}, {transform_indices = @transform_3, window_bounds = array<i64: 1, 4, 256>}]} {
    %c0 = arith.constant 0 : index
    %c0_0 = arith.constant 0 : index
    %c0_1 = arith.constant 0 : index
    %0 = vector.load %arg2[%c0, %c0_0, %c0_1] : memref<1x4x256xf32, #tpu.memory_space<vmem>>, vector<1x4x256xf32>
    %1 = vector.shape_cast %0 : vector<1x4x256xf32> to vector<4x256xf32>
    %2 = vector.extract_strided_slice %1 {offsets = [0, 0], sizes = [1, 256], strides = [1, 1]} : vector<4x256xf32> to vector<1x256xf32>
    %c0_2 = arith.constant 0 : index
    %3 = memref.load %arg4[%c0_2] : memref<4xf32, #tpu.memory_space<smem>>
    %4 = vector.broadcast %3 : f32 to vector<1x256xf32>
    %5 = arith.addf %2, %4 : vector<1x256xf32>
    %c0_3 = arith.constant 0 : index
    %c0_4 = arith.constant 0 : index
    %6 = memref.load %arg3[%c0_3, %c0_4] : memref<4x4xf32, #tpu.memory_space<smem>>
    %7 = vector.extract_strided_slice %1 {offsets = [0, 0], sizes = [1, 256], strides = [1, 1]} : vector<4x256xf32> to vector<1x256xf32>
    %8 = vector.broadcast %6 : f32 to vector<1x256xf32>
    %9 = arith.mulf %8, %7 : vector<1x256xf32>
    %10 = arith.addf %5, %9 : vector<1x256xf32>
    %c0_5 = arith.constant 0 : index
    %c1 = arith.constant 1 : index
    %11 = memref.load %arg3[%c0_5, %c1] : memref<4x4xf32, #tpu.memory_space<smem>>
    %12 = vector.extract_strided_slice %1 {offsets = [1, 0], sizes = [1, 256], strides = [1, 1]} : vector<4x256xf32> to vector<1x256xf32>
    %13 = vector.broadcast %11 : f32 to vector<1x256xf32>
    %14 = arith.mulf %13, %12 : vector<1x256xf32>
    %15 = arith.addf %10, %14 : vector<1x256xf32>
    %c0_6 = arith.constant 0 : index
    %c2 = arith.constant 2 : index
    %16 = memref.load %arg3[%c0_6, %c2] : memref<4x4xf32, #tpu.memory_space<smem>>
    %17 = vector.extract_strided_slice %1 {offsets = [2, 0], sizes = [1, 256], strides = [1, 1]} : vector<4x256xf32> to vector<1x256xf32>
    %18 = vector.broadcast %16 : f32 to vector<1x256xf32>
    %19 = arith.mulf %18, %17 : vector<1x256xf32>
    %20 = arith.addf %15, %19 : vector<1x256xf32>
    %c0_7 = arith.constant 0 : index
    %c3 = arith.constant 3 : index
    %21 = memref.load %arg3[%c0_7, %c3] : memref<4x4xf32, #tpu.memory_space<smem>>
    %22 = vector.extract_strided_slice %1 {offsets = [3, 0], sizes = [1, 256], strides = [1, 1]} : vector<4x256xf32> to vector<1x256xf32>
    %23 = vector.broadcast %21 : f32 to vector<1x256xf32>
    %24 = arith.mulf %23, %22 : vector<1x256xf32>
    %25 = arith.addf %20, %24 : vector<1x256xf32>
    %26 = vector.extract_strided_slice %1 {offsets = [1, 0], sizes = [1, 256], strides = [1, 1]} : vector<4x256xf32> to vector<1x256xf32>
    %c1_8 = arith.constant 1 : index
    %27 = memref.load %arg4[%c1_8] : memref<4xf32, #tpu.memory_space<smem>>
    %28 = vector.broadcast %27 : f32 to vector<1x256xf32>
    %29 = arith.addf %26, %28 : vector<1x256xf32>
    %c1_9 = arith.constant 1 : index
    %c0_10 = arith.constant 0 : index
    %30 = memref.load %arg3[%c1_9, %c0_10] : memref<4x4xf32, #tpu.memory_space<smem>>
    %31 = vector.extract_strided_slice %1 {offsets = [0, 0], sizes = [1, 256], strides = [1, 1]} : vector<4x256xf32> to vector<1x256xf32>
    %32 = vector.broadcast %30 : f32 to vector<1x256xf32>
    %33 = arith.mulf %32, %31 : vector<1x256xf32>
    %34 = arith.addf %29, %33 : vector<1x256xf32>
    %c1_11 = arith.constant 1 : index
    %c1_12 = arith.constant 1 : index
    %35 = memref.load %arg3[%c1_11, %c1_12] : memref<4x4xf32, #tpu.memory_space<smem>>
    %36 = vector.extract_strided_slice %1 {offsets = [1, 0], sizes = [1, 256], strides = [1, 1]} : vector<4x256xf32> to vector<1x256xf32>
    %37 = vector.broadcast %35 : f32 to vector<1x256xf32>
    %38 = arith.mulf %37, %36 : vector<1x256xf32>
    %39 = arith.addf %34, %38 : vector<1x256xf32>
    %c1_13 = arith.constant 1 : index
    %c2_14 = arith.constant 2 : index
    %40 = memref.load %arg3[%c1_13, %c2_14] : memref<4x4xf32, #tpu.memory_space<smem>>
    %41 = vector.extract_strided_slice %1 {offsets = [2, 0], sizes = [1, 256], strides = [1, 1]} : vector<4x256xf32> to vector<1x256xf32>
    %42 = vector.broadcast %40 : f32 to vector<1x256xf32>
    %43 = arith.mulf %42, %41 : vector<1x256xf32>
    %44 = arith.addf %39, %43 : vector<1x256xf32>
    %c1_15 = arith.constant 1 : index
    %c3_16 = arith.constant 3 : index
    %45 = memref.load %arg3[%c1_15, %c3_16] : memref<4x4xf32, #tpu.memory_space<smem>>
    %46 = vector.extract_strided_slice %1 {offsets = [3, 0], sizes = [1, 256], strides = [1, 1]} : vector<4x256xf32> to vector<1x256xf32>
    %47 = vector.broadcast %45 : f32 to vector<1x256xf32>
    %48 = arith.mulf %47, %46 : vector<1x256xf32>
    %49 = arith.addf %44, %48 : vector<1x256xf32>
    %50 = vector.extract_strided_slice %1 {offsets = [2, 0], sizes = [1, 256], strides = [1, 1]} : vector<4x256xf32> to vector<1x256xf32>
    %c2_17 = arith.constant 2 : index
    %51 = memref.load %arg4[%c2_17] : memref<4xf32, #tpu.memory_space<smem>>
    %52 = vector.broadcast %51 : f32 to vector<1x256xf32>
    %53 = arith.addf %50, %52 : vector<1x256xf32>
    %c2_18 = arith.constant 2 : index
    %c0_19 = arith.constant 0 : index
    %54 = memref.load %arg3[%c2_18, %c0_19] : memref<4x4xf32, #tpu.memory_space<smem>>
    %55 = vector.extract_strided_slice %1 {offsets = [0, 0], sizes = [1, 256], strides = [1, 1]} : vector<4x256xf32> to vector<1x256xf32>
    %56 = vector.broadcast %54 : f32 to vector<1x256xf32>
    %57 = arith.mulf %56, %55 : vector<1x256xf32>
    %58 = arith.addf %53, %57 : vector<1x256xf32>
    %c2_20 = arith.constant 2 : index
    %c1_21 = arith.constant 1 : index
    %59 = memref.load %arg3[%c2_20, %c1_21] : memref<4x4xf32, #tpu.memory_space<smem>>
    %60 = vector.extract_strided_slice %1 {offsets = [1, 0], sizes = [1, 256], strides = [1, 1]} : vector<4x256xf32> to vector<1x256xf32>
    %61 = vector.broadcast %59 : f32 to vector<1x256xf32>
    %62 = arith.mulf %61, %60 : vector<1x256xf32>
    %63 = arith.addf %58, %62 : vector<1x256xf32>
    %c2_22 = arith.constant 2 : index
    %c2_23 = arith.constant 2 : index
    %64 = memref.load %arg3[%c2_22, %c2_23] : memref<4x4xf32, #tpu.memory_space<smem>>
    %65 = vector.extract_strided_slice %1 {offsets = [2, 0], sizes = [1, 256], strides = [1, 1]} : vector<4x256xf32> to vector<1x256xf32>
    %66 = vector.broadcast %64 : f32 to vector<1x256xf32>
    %67 = arith.mulf %66, %65 : vector<1x256xf32>
    %68 = arith.addf %63, %67 : vector<1x256xf32>
    %c2_24 = arith.constant 2 : index
    %c3_25 = arith.constant 3 : index
    %69 = memref.load %arg3[%c2_24, %c3_25] : memref<4x4xf32, #tpu.memory_space<smem>>
    %70 = vector.extract_strided_slice %1 {offsets = [3, 0], sizes = [1, 256], strides = [1, 1]} : vector<4x256xf32> to vector<1x256xf32>
    %71 = vector.broadcast %69 : f32 to vector<1x256xf32>
    %72 = arith.mulf %71, %70 : vector<1x256xf32>
    %73 = arith.addf %68, %72 : vector<1x256xf32>
    %74 = vector.extract_strided_slice %1 {offsets = [3, 0], sizes = [1, 256], strides = [1, 1]} : vector<4x256xf32> to vector<1x256xf32>
    %c3_26 = arith.constant 3 : index
    %75 = memref.load %arg4[%c3_26] : memref<4xf32, #tpu.memory_space<smem>>
    %76 = vector.broadcast %75 : f32 to vector<1x256xf32>
    %77 = arith.addf %74, %76 : vector<1x256xf32>
    %c3_27 = arith.constant 3 : index
    %c0_28 = arith.constant 0 : index
    %78 = memref.load %arg3[%c3_27, %c0_28] : memref<4x4xf32, #tpu.memory_space<smem>>
    %79 = vector.extract_strided_slice %1 {offsets = [0, 0], sizes = [1, 256], strides = [1, 1]} : vector<4x256xf32> to vector<1x256xf32>
    %80 = vector.broadcast %78 : f32 to vector<1x256xf32>
    %81 = arith.mulf %80, %79 : vector<1x256xf32>
    %82 = arith.addf %77, %81 : vector<1x256xf32>
    %c3_29 = arith.constant 3 : index
    %c1_30 = arith.constant 1 : index
    %83 = memref.load %arg3[%c3_29, %c1_30] : memref<4x4xf32, #tpu.memory_space<smem>>
    %84 = vector.extract_strided_slice %1 {offsets = [1, 0], sizes = [1, 256], strides = [1, 1]} : vector<4x256xf32> to vector<1x256xf32>
    %85 = vector.broadcast %83 : f32 to vector<1x256xf32>
    %86 = arith.mulf %85, %84 : vector<1x256xf32>
    %87 = arith.addf %82, %86 : vector<1x256xf32>
    %c3_31 = arith.constant 3 : index
    %c2_32 = arith.constant 2 : index
    %88 = memref.load %arg3[%c3_31, %c2_32] : memref<4x4xf32, #tpu.memory_space<smem>>
    %89 = vector.extract_strided_slice %1 {offsets = [2, 0], sizes = [1, 256], strides = [1, 1]} : vector<4x256xf32> to vector<1x256xf32>
    %90 = vector.broadcast %88 : f32 to vector<1x256xf32>
    %91 = arith.mulf %90, %89 : vector<1x256xf32>
    %92 = arith.addf %87, %91 : vector<1x256xf32>
    %c3_33 = arith.constant 3 : index
    %c3_34 = arith.constant 3 : index
    %93 = memref.load %arg3[%c3_33, %c3_34] : memref<4x4xf32, #tpu.memory_space<smem>>
    %94 = vector.extract_strided_slice %1 {offsets = [3, 0], sizes = [1, 256], strides = [1, 1]} : vector<4x256xf32> to vector<1x256xf32>
    %95 = vector.broadcast %93 : f32 to vector<1x256xf32>
    %96 = arith.mulf %95, %94 : vector<1x256xf32>
    %97 = arith.addf %92, %96 : vector<1x256xf32>
    %98 = tpu.concatenate %25, %49, %73, %97 in 0 : vector<1x256xf32>, vector<1x256xf32>, vector<1x256xf32>, vector<1x256xf32> -> vector<4x256xf32>
    %c0_35 = arith.constant 0 : index
    %c0_36 = arith.constant 0 : index
    %c0_37 = arith.constant 0 : index
    %99 = vector.load %arg5[%c0_35, %c0_36, %c0_37] : memref<1x4x256xf32, #tpu.memory_space<vmem>>, vector<1x4x256xf32>
    %100 = vector.shape_cast %99 : vector<1x4x256xf32> to vector<4x256xf32>
    %101 = vector.shape_cast %98 : vector<4x256xf32> to vector<1x4x256xf32>
    tpu.vector_store %arg5[%c0_35, %c0_36, %c0_37], %101 {strides = array<i32>} : memref<1x4x256xf32, #tpu.memory_space<vmem>>, vector<1x4x256xf32>,
    return
  }
  func.func @transform_0(%arg0: i32, %arg1: i32) -> (i32, i32, i32) {
    %c0_i32 = arith.constant 0 : i32
    %c0_i32_0 = arith.constant 0 : i32
    return %arg0, %c0_i32, %arg1 : i32, i32, i32
  }
  func.func @transform_1(%arg0: i32, %arg1: i32) -> (i32, i32) {
    %c0_i32 = arith.constant 0 : i32
    %c0_i32_0 = arith.constant 0 : i32
    %c0_i32_1 = arith.constant 0 : i32
    return %c0_i32, %c0_i32_0 : i32, i32
  }
  func.func @transform_2(%arg0: i32, %arg1: i32) -> i32 {
    %c0_i32 = arith.constant 0 : i32
    %c0_i32_0 = arith.constant 0 : i32
    return %c0_i32 : i32
  }
  func.func @transform_3(%arg0: i32, %arg1: i32) -> (i32, i32, i32) {
    %c0_i32 = arith.constant 0 : i32
    %c0_i32_0 = arith.constant 0 : i32
    return %arg0, %c0_i32, %arg1 : i32, i32, i32
  }
}

</mosaic_0001>

<llo_original>
// kernel: tpu_custom_call.1
$region0: #{tpu_custom_call.1}
  #allocation0 [shape = 'u32[]', space=smem, size = 0x4, offset = 0x4, fixed_abs, tag = 'smem constant byte address 0x4 - core index']
  #allocation1 [shape = 'u32[144,128]{1,0:T(1,128)}', space=vmem, size = 0x12000, scoped, tag = 'internal scratch']
  %s0 = inlined_call_operand.hbm [shape: f32[2,4,256], index: 0, kind: input, shape index: {}]
  %s1 = inlined_call_operand.hbm [shape: f32[4,4], index: 1, kind: input, shape index: {}]
  %s2 = inlined_call_operand.vmem [shape: f32[4], index: 2, kind: input, shape index: {}]
  %s3 = inlined_call_operand.hbm [shape: f32[2,4,256], index: 3, kind: output, shape index: {}]
  %s4 = sld [smem:[#allocation0]]
  $region57: #{tpu_custom_call.1} parent=0
    _
  %s6 = ssub.s32 1, %s4
  %s7 = scalar_select 0, %s6, %s4
  $region1: #{tpu_custom_call.1} parent=0
    #allocation2 [shape = 'u8[8192]{0}', space=vmem, size = 0x2000, scoped, tag = 'input window, operand 0']
    #allocation3 [shape = 's32[2]{0}', space=sflag, size = 0x8, scoped, tag = 'scoped memory for tpu_custom_call.1']
    #allocation4 [shape = 's32[2]{0}', space=sflag, size = 0x8, scoped, tag = 'scoped memory for tpu_custom_call.1']
    #allocation5 [shape = 's32[2]{0}', space=sflag, size = 0x8, scoped, tag = 'scoped memory for tpu_custom_call.1']
    #allocation6 [shape = 's32[2]{0}', space=sflag, size = 0x8, scoped, tag = 'scoped memory for tpu_custom_call.1']
    #allocation7 [shape = 'u8[2048]{0}', space=smem, size = 0x800, scoped, tag = 'input window, operand 1, single buffered']
    #allocation8 [shape = 'u8[512]{0}', space=smem, size = 0x200, scoped, tag = 'input window, operand 2, single buffered']
    #allocation9 [shape = 'u8[8192]{0}', space=vmem, size = 0x2000, scoped, tag = 'output window, operand 0']
    %8 = vsyncpa [#allocation3], 0
    %s9 = scalar_lea.sflag [#allocation3], 1
    %10 = vsyncpa %s9, 0
    %11 = vsyncpa [#allocation5], 0
    %12 = vsyncpa [#allocation6], 0
    %13 = vsyncpa [#allocation4], 0
    %s14 = scalar_lea.sflag [#allocation4], 1
    %15 = vsyncpa %s14, 0
    loop: start=0, step=1, limit=4
    $region2: #{tpu_custom_call.1} parent=1 // loop_pre_header
      _
    $region3: #{tpu_custom_call.1} parent=1 // loop_header
      %s17 = sphi 0, %s21
      %p18 = scmp.ge.s32.totalorder %s17, 4
      %s24 = sphi 0, %s36
      %s25 = sphi 0, %s32
      %s26 = sphi 0, %s24
      %s27 = sphi 0, %s25
      %s28 = sphi 0, %s26
      %s29 = sphi 0, %s27
      %s41 = sphi 0, %s43
      %s44 = sphi 0, %s41
      %s45 = sphi 0, %s44
      %s61 = sphi 0, %s45
      %s65 = sphi 0, %s65
      %s67 = sphi 0, %s65
      %s68 = sphi 0, %s67
      %s82 = sphi 0, %s68
      %s86 = sphi 0, %s86
      %s88 = sphi 0, %s86
      %s89 = sphi 0, %s88
      %s103 = sphi 0, %s89
      %s111 = sphi 0, %s113
      %s114 = sphi 0, %s111
      %s115 = sphi 0, %s114
      %s131 = sphi 0, %s115
    $region4: #{tpu_custom_call.1} parent=1 // loop_header_branch
      %20 = sbr.rel (%p18) target = $region8
    $region5: #{tpu_custom_call.1} parent=1 // loop_body
      %s22 = ssub.s32 %s17, 1
      %s23 = ssub.s32 %s17, 2
      %s30 = sadd.s32 1, %s25
      %p31 = scmp.ge.s32.totalorder %s30, 1
      %s32 = scalar_select %p31, 0, %s30
      %s33 = sadd.s32 1, %s24
      %s34 = scalar_select %p31, %s33, %s24
      %p35 = scmp.ge.s32.totalorder %s34, 2
      %s36 = scalar_select %p35, 0, %s34
      %s37 = ssub.s32 %s24, %s36
      %s38 = ssub.s32 %s25, %s32
      %s39 = sor.u32 %s37, %s38
      %p40 = scmp.eq.s32.totalorder %s39, 0
      %s42 = sadd.s32 %s41, 1
      %s43 = scalar_select %p40, %s41, %s42
      %p46 = pneg %p40
      %p47 = scmp.eq.s32.totalorder %s17, 1
      %p48 = por %p46, %p47
      %p49 = scmp.ne.s32.totalorder %s41, %s44
      %p50 = scmp.eq.s32.totalorder %s17, 0
      %p51 = por %p49, %p50
      %p52 = scmp.ne.s32.totalorder %s41, %s44
      %p53 = scmp.eq.s32.totalorder %s22, 1
      %p54 = por %p52, %p53
      %p55 = scmp.ne.s32.totalorder %s44, %s45
      %p56 = scmp.eq.s32.totalorder %s22, 0
      %p57 = por %p55, %p56
      %p58 = scmp.ne.s32.totalorder %s44, %s45
      %p59 = scmp.eq.s32.totalorder %s23, 1
      %p60 = por %p58, %p59
      %p62 = scmp.ne.s32.totalorder %s45, %s61
      %p63 = scmp.eq.s32.totalorder %s23, 0
      %p64 = por %p62, %p63
      %s66 = sadd.s32 %s65, 1
      %p69 = scmp.eq.s32.totalorder %s17, 1
      %p70 = scmp.ne.s32.totalorder %s65, %s67
      %p71 = scmp.eq.s32.totalorder %s17, 0
      %p72 = por %p70, %p71
      %p73 = scmp.ne.s32.totalorder %s65, %s67
      %p74 = scmp.eq.s32.totalorder %s22, 1
      %p75 = por %p73, %p74
      %p76 = scmp.ne.s32.totalorder %s67, %s68
      %p77 = scmp.eq.s32.totalorder %s22, 0
      %p78 = por %p76, %p77
      %p79 = scmp.ne.s32.totalorder %s67, %s68
      %p80 = scmp.eq.s32.totalorder %s23, 1
      %p81 = por %p79, %p80
      %p83 = scmp.ne.s32.totalorder %s68, %s82
      %p84 = scmp.eq.s32.totalorder %s23, 0
      %p85 = por %p83, %p84
      %s87 = sadd.s32 %s86, 1
      %p90 = scmp.eq.s32.totalorder %s17, 1
      %p91 = scmp.ne.s32.totalorder %s86, %s88
      %p92 = scmp.eq.s32.totalorder %s17, 0
      %p93 = por %p91, %p92
      %p94 = scmp.ne.s32.totalorder %s86, %s88
      %p95 = scmp.eq.s32.totalorder %s22, 1
      %p96 = por %p94, %p95
      %p97 = scmp.ne.s32.totalorder %s88, %s89
      %p98 = scmp.eq.s32.totalorder %s22, 0
      %p99 = por %p97, %p98
      %p100 = scmp.ne.s32.totalorder %s88, %s89
      %p101 = scmp.eq.s32.totalorder %s23, 1
      %p102 = por %p100, %p101
      %p104 = scmp.ne.s32.totalorder %s89, %s103
      %p105 = scmp.eq.s32.totalorder %s23, 0
      %p106 = por %p104, %p105
      %s107 = ssub.s32 %s24, %s36
      %s108 = ssub.s32 %s25, %s32
      %s109 = sor.u32 %s107, %s108
      %p110 = scmp.eq.s32.totalorder %s109, 0
      %s112 = sadd.s32 %s111, 1
      %s113 = scalar_select %p110, %s111, %s112
      %p116 = pneg %p110
      %p117 = scmp.eq.s32.totalorder %s17, 1
      %p118 = por %p116, %p117
      %p119 = scmp.ne.s32.totalorder %s111, %s114
      %p120 = scmp.eq.s32.totalorder %s17, 0
      %p121 = por %p119, %p120
      %p122 = scmp.ne.s32.totalorder %s111, %s114
      %p123 = scmp.eq.s32.totalorder %s22, 1
      %p124 = por %p122, %p123
      %p125 = scmp.ne.s32.totalorder %s114, %s115
      %p126 = scmp.eq.s32.totalorder %s22, 0
      %p127 = por %p125, %p126
      %p128 = scmp.ne.s32.totalorder %s114, %s115
      %p129 = scmp.eq.s32.totalorder %s23, 1
      %p130 = por %p128, %p129
      %p132 = scmp.ne.s32.totalorder %s115, %s131
      %p133 = scmp.eq.s32.totalorder %s23, 0
      %p134 = por %p132, %p133
      %p135 = scmp.le.s32.totalorder 1, %s17
      %p136 = scmp.lt.s32.totalorder %s17, 3
      %p137 = pnand %p135, %p136
      %p138 = pneg %p137
      // Predicated region
      $region9: #{tpu_custom_call.1} parent=5 // pred_check
        _
      $region10: #{tpu_custom_call.1} parent=5 // pred_check_branch
        %140 = sbr.rel (%p137) target = $region12
      $region11: #{tpu_custom_call.1} parent=5 // pred_region
        %s141 = ssub.s32 %s17, 1
        // Predicated region
        $region13: #{tpu_custom_call.1} parent=11 // pred_check
          %p142 = pneg %p78
        $region14: #{tpu_custom_call.1} parent=11 // pred_check_branch
          %144 = sbr.rel (%p142) target = $region16
        $region15: #{tpu_custom_call.1} parent=11 // pred_region
          %s146 = ssub.s32 64, 64
          %147 = vsyncadd [#allocation5], %s146
          %150 = dma.hbm_to_smem %s1, 64, [#allocation7], [#allocation5]
        $region16: #{tpu_custom_call.1} parent=11 // pred_fallthru
          _
        // Predicated region
        $region17: #{tpu_custom_call.1} parent=11 // pred_check
          %p151 = pneg %p99
        $region18: #{tpu_custom_call.1} parent=11 // pred_check_branch
          %153 = sbr.rel (%p151) target = $region20
        $region19: #{tpu_custom_call.1} parent=11 // pred_region
          %s155 = ssub.s32 16, 16
          %156 = vsyncadd [#allocation6], %s155
          %s158 = sshll.u32 %s2, 4
          %s159 = int_to_ptr.vmem [resolvable:$true] %s158
          %161 = dma.vmem_to_smem %s159, 16, [#allocation8], [#allocation6]
        $region20: #{tpu_custom_call.1} parent=11 // pred_fallthru
          _
      $region12: #{tpu_custom_call.1} parent=5 // pred_fallthru
        _
      %p162 = scmp.lt.s32.totalorder %s17, 2
      // Predicated region
      $region21: #{tpu_custom_call.1} parent=5 // pred_check
        %p163 = pneg %p162
      $region22: #{tpu_custom_call.1} parent=5 // pred_check_branch
        %165 = sbr.rel (%p163) target = $region24
      $region23: #{tpu_custom_call.1} parent=5 // pred_region
        // Predicated region
        $region25: #{tpu_custom_call.1} parent=23 // pred_check
          %p166 = pneg %p51
        $region26: #{tpu_custom_call.1} parent=23 // pred_check_branch
          %168 = sbr.rel (%p166) target = $region28
        $region27: #{tpu_custom_call.1} parent=23 // pred_region
          %s169 = sand.u32 %s41, 1
          %s170 = scalar_lea.sflag [#allocation3], %s169
          %s171 = sand.u32 %s41, 1
          %s172 = smul.addr %s171, 8
          %s173 = scalar_lea.vmem [#allocation2], %s172
          %s174 = smul.u32 2, %s25
          %s176 = ssub.s32 128, 128
          %177 = vsyncadd %s170, %s176
          %s178 = smul.addr %s24, 2
          %s179 = sadd.s32 %s174, %s178
          %s180 = smul.addr %s179, 64
          %s181 = scalar_lea.hbm %s0, %s180
          %s183 = sshll.u32 %s173, 4
          %s184 = int_to_ptr.vmem [resolvable:$true] %s183
          %186 = dma.hbm_to_vmem [thread:$0]  %s181, 128, %s184, %s170
        $region28: #{tpu_custom_call.1} parent=23 // pred_fallthru
          _
      $region24: #{tpu_custom_call.1} parent=5 // pred_fallthru
        _
      %p187 = scmp.le.s32.totalorder 1, %s17
      %p188 = scmp.lt.s32.totalorder %s17, 3
      %p189 = pnand %p187, %p188
      %p190 = pneg %p189
      // Predicated region
      $region29: #{tpu_custom_call.1} parent=5 // pred_check
        _
      $region30: #{tpu_custom_call.1} parent=5 // pred_check_branch
        %192 = sbr.rel (%p189) target = $region32
      $region31: #{tpu_custom_call.1} parent=5 // pred_region
        %s193 = ssub.s32 %s17, 1
        %s194 = sand.u32 %s44, 1
        %s195 = scalar_lea.sflag [#allocation3], %s194
        %s196 = sand.u32 %s44, 1
        %s197 = smul.addr %s196, 8
        %s198 = scalar_lea.vmem [#allocation2], %s197
        // Predicated region
        $region33: #{tpu_custom_call.1} parent=31 // pred_check
          %p199 = pneg %p57
        $region34: #{tpu_custom_call.1} parent=31 // pred_check_branch
          %201 = sbr.rel (%p199) target = $region36
        $region35: #{tpu_custom_call.1} parent=31 // pred_region
          %202 = dma.done %s195, 128
        $region36: #{tpu_custom_call.1} parent=31 // pred_fallthru
          _
        // Predicated region
        $region37: #{tpu_custom_call.1} parent=31 // pred_check
          %p203 = pneg %p78
        $region38: #{tpu_custom_call.1} parent=31 // pred_check_branch
          %205 = sbr.rel (%p203) target = $region40
        $region39: #{tpu_custom_call.1} parent=31 // pred_region
          %206 = dma.done [#allocation5], 64
        $region40: #{tpu_custom_call.1} parent=31 // pred_fallthru
          _
        // Predicated region
        $region41: #{tpu_custom_call.1} parent=31 // pred_check
          %p207 = pneg %p99
        $region42: #{tpu_custom_call.1} parent=31 // pred_check_branch
          %209 = sbr.rel (%p207) target = $region44
        $region43: #{tpu_custom_call.1} parent=31 // pred_region
          %210 = dma.done [#allocation6], 16
        $region44: #{tpu_custom_call.1} parent=31 // pred_fallthru
          _
        %211 = sfence
        %s212 = sand.u32 %s44, 1
        %s213 = scalar_lea.sflag [#allocation3], %s212
        %s214 = sand.u32 %s44, 1
        %s215 = smul.addr %s214, 8
        %s216 = scalar_lea.vmem [#allocation2], %s215
        %p217 = pneg %p57
        %p218 = pneg %p54
        %p219 = pneg %p78
        %p220 = pneg %p75
        %p221 = pneg %p99
        %p222 = pneg %p96
        %p223 = pneg %p127
        %p224 = pneg %p124
        %s225 = sand.u32 %s114, 1
        %s226 = scalar_lea.sflag [#allocation4], %s225
        %s227 = sand.u32 %s114, 1
        %s228 = smul.addr %s227, 8
        %s229 = scalar_lea.vmem [#allocation9], %s228
        %s230 = smul.u32 2, %s27
        %s231 = smul.u32 2, %s27
        %v232 = vld [vmem:[%s198] sm:$0xff]
        %s233 = sld [smem:[#allocation8]]
        %v234 = vstv %s233
        %v235 = vadd.f32 %v232, %v234
        %s236 = sld [smem:[#allocation7]]
        %v237 = vstv %s236
        %v238 = vmul.f32 %v237, %v232
        %v239 = vadd.f32 %v235, %v238
        %s240 = sld [smem:[#allocation7 + $0x1]]
        %v241 = vstv %s240
        %v242 = vmul.f32 %v241, %v232
        %v244 = vrot.slane %v242, 5
        %v245 = vrot.slane %v244, 4
        %v247 = vadd.f32 %v239, %v245
        %s248 = sld [smem:[#allocation7 + $0x2]]
        %v249 = vstv %s248
        %v250 = vmul.f32 %v249, %v232
        %v252 = vrot.slane %v250, 6
        %v253 = vrot.slane %v252, 4
        %v255 = vadd.f32 %v247, %v253
        %s256 = sld [smem:[#allocation7 + $0x3]]
        %v257 = vstv %s256
        %v258 = vmul.f32 %v257, %v232
        %v260 = vrot.slane %v258, 7
        %v261 = vrot.slane %v260, 4
        %v263 = vadd.f32 %v255, %v261
        %s264 = sld [smem:[#allocation8 + $0x1]]
        %v265 = vstv %s264
        %v266 = vadd.f32 %v232, %v265
        %s267 = sld [smem:[#allocation7 + $0x80]]
        %v268 = vstv %s267
        %v269 = vmul.f32 %v268, %v232
        %v271 = vrot.slane %v269, 7
        %v273 = vadd.f32 %v266, %v271
        %s274 = sld [smem:[#allocation7 + $0x81]]
        %v275 = vstv %s274
        %v276 = vmul.f32 %v275, %v232
        %v277 = vadd.f32 %v273, %v276
        %s278 = sld [smem:[#allocation7 + $0x82]]
        %v279 = vstv %s278
        %v280 = vmul.f32 %v279, %v232
        %v282 = vrot.slane %v280, 5
        %v283 = vrot.slane %v282, 4
        %v285 = vadd.f32 %v277, %v283
        %s286 = sld [smem:[#allocation7 + $0x83]]
        %v287 = vstv %s286
        %v288 = vmul.f32 %v287, %v232
        %v290 = vrot.slane %v288, 6
        %v291 = vrot.slane %v290, 4
        %v293 = vadd.f32 %v285, %v291
        %s294 = sld [smem:[#allocation8 + $0x2]]
        %v295 = vstv %s294
        %v296 = vadd.f32 %v232, %v295
        %s297 = sld [smem:[#allocation7 + $0x100]]
        %v298 = vstv %s297
        %v299 = vmul.f32 %v298, %v232
        %v301 = vrot.slane %v299, 6
        %v303 = vadd.f32 %v296, %v301
        %s304 = sld [smem:[#allocation7 + $0x101]]
        %v305 = vstv %s304
        %v306 = vmul.f32 %v305, %v232
        %v308 = vrot.slane %v306, 7
        %v310 = vadd.f32 %v303, %v308
        %s311 = sld [smem:[#allocation7 + $0x102]]
        %v312 = vstv %s311
        %v313 = vmul.f32 %v312, %v232
        %v314 = vadd.f32 %v310, %v313
        %s315 = sld [smem:[#allocation7 + $0x103]]
        %v316 = vstv %s315
        %v317 = vmul.f32 %v316, %v232
        %v319 = vrot.slane %v317, 5
        %v320 = vrot.slane %v319, 4
        %v322 = vadd.f32 %v314, %v320
        %s323 = sld [smem:[#allocation8 + $0x3]]
        %v324 = vstv %s323
        %v325 = vadd.f32 %v232, %v324
        %s326 = sld [smem:[#allocation7 + $0x180]]
        %v327 = vstv %s326
        %v328 = vmul.f32 %v327, %v232
        %v330 = vrot.slane %v328, 5
        %v332 = vadd.f32 %v325, %v330
        %s333 = sld [smem:[#allocation7 + $0x181]]
        %v334 = vstv %s333
        %v335 = vmul.f32 %v334, %v232
        %v337 = vrot.slane %v335, 6
        %v339 = vadd.f32 %v332, %v337
        %s340 = sld [smem:[#allocation7 + $0x182]]
        %v341 = vstv %s340
        %v342 = vmul.f32 %v341, %v232
        %v344 = vrot.slane %v342, 7
        %v346 = vadd.f32 %v339, %v344
        %s347 = sld [smem:[#allocation7 + $0x183]]
        %v348 = vstv %s347
        %v349 = vmul.f32 %v348, %v232
        %v350 = vadd.f32 %v346, %v349
        %v352 = vlaneseq
        %v353 = vshrl.u32 %v352, 7
        %v354 = vsub.s32 0, %v353
        %v355 = vrot.slane %v263, %v354
        %v356 = vlaneseq
        %v357 = vshrl.u32 %v356, 7
        %v358 = vsub.s32 4, %v357
        %v359 = vrot.slane %v263, %v358
        %v363 = vlaneseq
        %v364 = vshrl.u32 %v363, 7
        %v365 = vsub.s32 1, %v364
        %v366 = vrot.slane %v293, %v365
        %v367 = vlaneseq
        %v368 = vshrl.u32 %v367, 7
        %v369 = vsub.s32 5, %v368
        %v370 = vrot.slane %v293, %v369
        %v374 = vlaneseq
        %v375 = vshrl.u32 %v374, 7
        %v376 = vsub.s32 2, %v375
        %v377 = vrot.slane %v322, %v376
        %v378 = vlaneseq
        %v379 = vshrl.u32 %v378, 7
        %v380 = vsub.s32 6, %v379
        %v381 = vrot.slane %v322, %v380
        %v385 = vlaneseq
        %v386 = vshrl.u32 %v385, 7
        %v387 = vsub.s32 3, %v386
        %v388 = vrot.slane %v350, %v387
        %v389 = vlaneseq
        %v390 = vshrl.u32 %v389, 7
        %v391 = vsub.s32 7, %v390
        %v392 = vrot.slane %v350, %v391
        %vm395 = vcmask 1040384
        %v396 = vsel %vm395, %v355, %v366
        %v397 = vsel %vm395, %v359, %v370
        %vm398 = vcmask 1041408
        %v399 = vsel %vm398, %v396, %v377
        %v400 = vsel %vm398, %v397, %v381
        %vm401 = vcmask 1042432
        %v402 = vsel %vm401, %v399, %v388
        %v403 = vsel %vm401, %v400, %v392
        %v406 = vcombine.low %v402, %v403
        %408 = vst [vmem:[%s229] sm:$0xff] %v406
        %s409 = sand.u32 %s114, 1
        %s410 = scalar_lea.sflag [#allocation4], %s409
        %s411 = sand.u32 %s114, 1
        %s412 = smul.addr %s411, 8
        %s413 = scalar_lea.vmem [#allocation9], %s412
        // Predicated region
        $region45: #{tpu_custom_call.1} parent=31 // pred_check
          %p414 = pneg %p124
        $region46: #{tpu_custom_call.1} parent=31 // pred_check_branch
          %416 = sbr.rel (%p414) target = $region48
        $region47: #{tpu_custom_call.1} parent=31 // pred_region
          %s417 = smul.u32 2, %s27
          %s419 = ssub.s32 128, 128
          %420 = vsyncadd %s410, %s419
          %s421 = smul.addr %s26, 2
          %s422 = sadd.s32 %s417, %s421
          %s423 = smul.addr %s422, 64
          %s424 = scalar_lea.hbm %s3, %s423
          %s426 = sshll.u32 %s413, 4
          %s427 = int_to_ptr.vmem [resolvable:$true] %s426
          %429 = dma.vmem_to_hbm [thread:$0]  %s427, 128, %s424, %s410
        $region48: #{tpu_custom_call.1} parent=31 // pred_fallthru
          _
      $region32: #{tpu_custom_call.1} parent=5 // pred_fallthru
        _
      %p430 = scmp.le.s32.totalorder 2, %s17
      // Predicated region
      $region49: #{tpu_custom_call.1} parent=5 // pred_check
        %p431 = pneg %p430
      $region50: #{tpu_custom_call.1} parent=5 // pred_check_branch
        %433 = sbr.rel (%p431) target = $region52
      $region51: #{tpu_custom_call.1} parent=5 // pred_region
        %s434 = ssub.s32 %s17, 2
        // Predicated region
        $region53: #{tpu_custom_call.1} parent=51 // pred_check
          %p435 = pneg %p130
        $region54: #{tpu_custom_call.1} parent=51 // pred_check_branch
          %437 = sbr.rel (%p435) target = $region56
        $region55: #{tpu_custom_call.1} parent=51 // pred_region
          %s438 = sand.u32 %s115, 1
          %s439 = scalar_lea.sflag [#allocation4], %s438
          %s440 = sand.u32 %s115, 1
          %s441 = smul.addr %s440, 8
          %s442 = scalar_lea.vmem [#allocation9], %s441
          %443 = dma.done %s439, 128
        $region56: #{tpu_custom_call.1} parent=51 // pred_fallthru
          _
      $region52: #{tpu_custom_call.1} parent=5 // pred_fallthru
        _
    $region6: #{tpu_custom_call.1} parent=1 // loop_footer
      %s21 = sadd.s32 1, %s17
    $region7: #{tpu_custom_call.1} parent=1 // loop_footer_branch
      %16 = sbr.rel target = $region3
    $region8: #{tpu_custom_call.1} parent=1 // loop_exit
      _
    %444 = vsyncpa [#allocation3], 1
    %s445 = scalar_lea.sflag [#allocation3], 1
    %446 = vsyncpa %s445, 1
    %447 = vsyncpa [#allocation4], 1
    %s448 = scalar_lea.sflag [#allocation4], 1
    %449 = vsyncpa %s448, 1
    %450 = vsyncpa [#allocation5], 1
    %s451 = scalar_lea.sflag [#allocation5], 1
    %452 = vsyncpa %s451, 1
    %453 = vsyncpa [#allocation6], 1
    %s454 = scalar_lea.sflag [#allocation6], 1
    %455 = vsyncpa %s454, 1

</llo_original>
